<compile_context>
chip_gen: v7x
topology: tpu7x:2x2x1
jax: 0.10.0
libtpu: 0.0.40
codegen_flags: <defaults>
</compile_context>

<pallas_src>
import jax
import jax.numpy as jnp
from jax.experimental import pallas as pl
from jax.experimental.pallas import tpu as pltpu


OUT_DIM = 30            # the module always appends 30 as the last layer size
WIDE_DIM = 2 * OUT_DIM  # single wide matmul emits [ z | z_third ]


def _round_up(n, m):
    return (n + m - 1) // m * m


def _mlp_postproc_kernel(x_ref, w1_ref, b1_ref, w2_ref, b2_ref, t_ref, o_ref):
    """Fused 2-layer MLP + LinearModel.forward postprocessing for one batch tile.

    x_ref : (TB, D0)    input tile (bf16 or f32 matmul operand)
    w1_ref: (D0, H)     first Linear weight (transposed vs torch), VMEM-resident
    b1_ref: (1, H)      first Linear bias (f32)
    w2_ref: (H, 60)     [w2 | w2_gathered] second Linear weight, widened at trace time
    b2_ref: (1, 60)     [b2 | b2_gathered] second Linear bias (f32)
    t_ref : (1, 30)     constant selector: 1.0 on columns j with j % 3 == 2, else 0.0
    o_ref : (TB, 30)    output tile (later viewed as (TB, 10, 3))
    """
    # Linear -> ReLU (MXU matmul with f32 accumulation; bias/ReLU in f32 on the VPU).
    h = jnp.dot(x_ref[...], w1_ref[...], preferred_element_type=jnp.float32)
    h = jnp.maximum(h + b1_ref[...], 0.0)

    # Single wide second Linear:
    #   columns [0:30)  -> z        (raw second-layer output)
    #   columns [30:60) -> z_third  (column 3g+2 replicated across group g; exact copies of
    #                                the same weight columns, so identical dot products --
    #                                no cross-lane broadcast and no extra dependent matmul)
    zz = jnp.dot(h.astype(w2_ref.dtype), w2_ref[...],
                 preferred_element_type=jnp.float32) + b2_ref[...]
    z = zz[:, :OUT_DIM]
    z3 = zz[:, OUT_DIM:]

    # Postprocess in f32: y[:,:,2] = sigmoid(.)*20 ; mask = y[:,:,2] > 0.5 ; y[:,:,:2] = tanh(.)*mask
    third = jax.nn.sigmoid(z3) * 20.0               # already group-broadcast
    gate = (third > 0.5).astype(jnp.float32)        # mask, already group-broadcast
    t = t_ref[...]                                  # constant third-column selector
    out = t * third + (1.0 - t) * (jnp.tanh(z) * gate)

    o_ref[...] = out.astype(o_ref.dtype)


def linear_model_forward(x, params, *, block_b=512, matmul_dtype=jnp.bfloat16):
    """params = (w1, b1, w2, b2) with shapes (D0,H), (1,H), (H,30), (1,30)."""
    w1, b1, w2, b2 = params
    B, D0 = x.shape
    H = w1.shape[1]

    # Fold the constant group-gather into the second layer (trace-time, exact column copies):
    #   w2g[:, j] = w2[:, 3*(j//3) + 2],   b2g[:, j] = b2[:, 3*(j//3) + 2]
    grp_third = 3 * (jnp.arange(OUT_DIM) // 3) + 2
    w2_wide = jnp.concatenate([w2, w2[:, grp_third]], axis=1)        # (H, 60)
    b2_wide = jnp.concatenate([b2, b2[:, grp_third]], axis=1)        # (1, 60)

    # Constant third-column selector (replaces the in-kernel iota/mod/compare/select).
    t_sel = ((jnp.arange(OUT_DIM) % 3) == 2).astype(jnp.float32)[None, :]  # (1, 30)

    # bf16 MXU operands (f32 accumulation); biases & postprocess stay f32.
    x_mm = x.astype(matmul_dtype)
    w1_mm = w1.astype(matmul_dtype)
    w2_mm = w2_wide.astype(matmul_dtype)
    b1_f = b1.astype(jnp.float32)
    b2_f = b2_wide.astype(jnp.float32)

    # Batch tiling: TB multiple of 8; weights stay resident via constant index_maps.
    tb = min(block_b, _round_up(B, 8))
    Bp = _round_up(B, tb)
    if Bp != B:
        x_mm = jnp.pad(x_mm, ((0, Bp - B), (0, 0)))
    grid = (Bp // tb,)

    resident = lambda shape: pl.BlockSpec(shape, lambda i: (0, 0))

    itemsize = x_mm.dtype.itemsize
    bytes_accessed = int(
        x_mm.size * itemsize
        + w1_mm.size * itemsize + w2_mm.size * itemsize
        + b1_f.size * 4 + b2_f.size * 4 + t_sel.size * 4
        + Bp * OUT_DIM * 4)
    cost = pl.CostEstimate(
        flops=2 * Bp * (D0 * H + H * WIDE_DIM),
        transcendentals=Bp * (OUT_DIM + OUT_DIM),   # sigmoid(30) + tanh(30) per row
        bytes_accessed=bytes_accessed)

    y_flat = pl.pallas_call(
        _mlp_postproc_kernel,
        out_shape=jax.ShapeDtypeStruct((Bp, OUT_DIM), jnp.float32),
        grid=grid,
        in_specs=[
            pl.BlockSpec((tb, D0), lambda i: (i, 0)),   # x: tiled over batch
            resident((D0, H)),
            resident((1, H)),
            resident((H, WIDE_DIM)),
            resident((1, WIDE_DIM)),
            resident((1, OUT_DIM)),
        ],
        out_specs=pl.BlockSpec((tb, OUT_DIM), lambda i: (i, 0)),
        compiler_params=pltpu.CompilerParams(
            dimension_semantics=("parallel",),          # shard batch tiles across TCs on v7x
            vmem_limit_bytes=32 * 1024 * 1024),         # budgeted for v7x's smaller VMEM
        cost_estimate=cost,
        # TODO(synk): for very large B on v5e, a 128-lane-padded output slab could relieve the
        # single vector-store slot; left as-is since output bytes are tiny here.
    )(x_mm, w1_mm, b1_f, w2_mm, b2_f, t_sel)

    # y.view(-1, 10, 3), dropping any batch padding.
    return y_flat[:B].reshape(-1, 10, 3)


def _reference_forward(x, params, *, matmul_dtype=jnp.bfloat16):
    """Pure-JAX reference mirroring the PyTorch semantics (same bf16 operand casts)."""
    w1, b1, w2, b2 = params
    h = jnp.dot(x.astype(matmul_dtype), w1.astype(matmul_dtype),
                preferred_element_type=jnp.float32) + b1
    h = jnp.maximum(h, 0.0)
    z = jnp.dot(h.astype(matmul_dtype), w2.astype(matmul_dtype),
                preferred_element_type=jnp.float32) + b2
    z = z.reshape(-1, 10, 3)
    front = jnp.tanh(z[:, :, :2])
    third = jax.nn.sigmoid(z[:, :, 2]) * 20.0
    mask = (third > 0.5).astype(jnp.float32)
    return jnp.concatenate([front * mask[:, :, None], third[:, :, None]], axis=-1)


def _reference_forward_f32(x, params):
    """Full-precision reference (semantic sanity check only)."""
    w1, b1, w2, b2 = params
    h = jnp.maximum(x @ w1 + b1, 0.0)
    z = (h @ w2 + b2).reshape(-1, 10, 3)
    front = jnp.tanh(z[:, :, :2])
    third = jax.nn.sigmoid(z[:, :, 2]) * 20.0
    mask = (third > 0.5).astype(jnp.float32)
    return jnp.concatenate([front * mask[:, :, None], third[:, :, None]], axis=-1)


def init_params(key, sizes):
    """Deterministic init mimicking nn.Linear's U(-1/sqrt(fan_in), 1/sqrt(fan_in))."""
    sizes = list(sizes) + [OUT_DIM]
    assert len(sizes) == 3, "this script implements the 2-layer (sizes=(d0, d1)) variant"
    k1, k2, k3, k4 = jax.random.split(key, 4)
    d0, d1, d2 = sizes
    lim1 = 1.0 / jnp.sqrt(d0)
    lim2 = 1.0 / jnp.sqrt(d1)
    w1 = jax.random.uniform(k1, (d0, d1), jnp.float32, -lim1, lim1)
    b1 = jax.random.uniform(k2, (1, d1), jnp.float32, -lim1, lim1)
    w2 = jax.random.uniform(k3, (d1, d2), jnp.float32, -lim2, lim2)
    b2 = jax.random.uniform(k4, (1, d2), jnp.float32, -lim2, lim2)
    return w1, b1, w2, b2


if __name__ == "__main__":
    key = jax.random.PRNGKey(0)
    kx, kp = jax.random.split(key)

    B, D0, H = 8, 32, 64            # LinearModel(32, 64) -> MLP 32 -> 64 -> 30
    x = jax.random.normal(kx, (B, D0), jnp.float32)
    params = init_params(kp, (D0, H))

    y = linear_model_forward(x, params)
    y = jax.block_until_ready(y)
    assert y.shape == (B, 10, 3), y.shape

    # Bit-for-bit-ish check against a reference with matching bf16 matmul operands.
    y_ref = _reference_forward(x, params)
    assert jnp.allclose(y, y_ref, atol=1e-4, rtol=1e-4), "mismatch vs bf16-operand reference"

    # Loose semantic check against the full-f32 PyTorch-equivalent math.
    y_ref32 = _reference_forward_f32(x, params)
    assert jnp.allclose(y, y_ref32, atol=5e-2, rtol=5e-2), "mismatch vs f32 reference"

    print("KERNEL_OK")
</pallas_src>

<mosaic_0001>
module attributes {stable_mosaic.version = 11 : i64} {
  func.func @_mlp_postproc_kernel(%arg0: i32, %arg1: memref<8x32xbf16, #tpu.memory_space<vmem>>, %arg2: memref<32x64xbf16, #tpu.memory_space<vmem>>, %arg3: memref<1x64xf32, #tpu.memory_space<vmem>>, %arg4: memref<64x60xbf16, #tpu.memory_space<vmem>>, %arg5: memref<1x60xf32, #tpu.memory_space<vmem>>, %arg6: memref<1x30xf32, #tpu.memory_space<vmem>>, %arg7: memref<8x30xf32, #tpu.memory_space<vmem>>) attributes {dimension_semantics = [#tpu.dimension_semantics<parallel>], iteration_bounds = array<i64: 1>, scalar_prefetch = 0 : i64, scratch_operands = 0 : i64, tpu.core_type = #tpu.core_type<tc>, window_params = [{transform_indices = @transform_0, window_bounds = array<i64: 8, 32>}, {pipeline_mode = #tpu.pipeline_mode<synchronous>, transform_indices = @transform_1, window_bounds = array<i64: 32, 64>}, {pipeline_mode = #tpu.pipeline_mode<synchronous>, transform_indices = @transform_2, window_bounds = array<i64: 1, 64>}, {pipeline_mode = #tpu.pipeline_mode<synchronous>, transform_indices = @transform_3, window_bounds = array<i64: 64, 60>}, {pipeline_mode = #tpu.pipeline_mode<synchronous>, transform_indices = @transform_4, window_bounds = array<i64: 1, 60>}, {pipeline_mode = #tpu.pipeline_mode<synchronous>, transform_indices = @transform_5, window_bounds = array<i64: 1, 30>}, {transform_indices = @transform_6, window_bounds = array<i64: 8, 30>}]} {
    %c0 = arith.constant 0 : index
    %c0_0 = arith.constant 0 : index
    %0 = vector.load %arg1[%c0, %c0_0] : memref<8x32xbf16, #tpu.memory_space<vmem>>, vector<8x32xbf16>
    %c0_1 = arith.constant 0 : index
    %c0_2 = arith.constant 0 : index
    %1 = vector.load %arg2[%c0_1, %c0_2] : memref<32x64xbf16, #tpu.memory_space<vmem>>, vector<32x64xbf16>
    %cst = arith.constant dense<0.000000e+00> : vector<8x64xf32>
    %2 = tpu.matmul %0, %1, %cst {dimension_numbers = #tpu.dot_dimension_numbers<[1], [0], [0], [1], [0, 0, 1, 1], [], []>} : vector<8x32xbf16>, vector<32x64xbf16>, vector<8x64xf32> -> vector<8x64xf32>
    %c0_3 = arith.constant 0 : index
    %c0_4 = arith.constant 0 : index
    %3 = vector.load %arg3[%c0_3, %c0_4] : memref<1x64xf32, #tpu.memory_space<vmem>>, vector<1x64xf32>
    %4 = vector.broadcast %3 : vector<1x64xf32> to vector<8x64xf32>
    %5 = arith.addf %2, %4 : vector<8x64xf32>
    %cst_5 = arith.constant 0.000000e+00 : f32
    %6 = vector.broadcast %cst_5 : f32 to vector<8x64xf32>
    %7 = arith.maximumf %5, %6 : vector<8x64xf32>
    %8 = arith.truncf %7 : vector<8x64xf32> to vector<8x64xbf16>
    %c0_6 = arith.constant 0 : index
    %c0_7 = arith.constant 0 : index
    %9 = vector.load %arg4[%c0_6, %c0_7] : memref<64x60xbf16, #tpu.memory_space<vmem>>, vector<64x60xbf16>
    %cst_8 = arith.constant dense<0.000000e+00> : vector<8x60xf32>
    %10 = tpu.matmul %8, %9, %cst_8 {dimension_numbers = #tpu.dot_dimension_numbers<[1], [0], [0], [1], [0, 0, 1, 1], [], []>} : vector<8x64xbf16>, vector<64x60xbf16>, vector<8x60xf32> -> vector<8x60xf32>
    %c0_9 = arith.constant 0 : index
    %c0_10 = arith.constant 0 : index
    %11 = vector.load %arg5[%c0_9, %c0_10] : memref<1x60xf32, #tpu.memory_space<vmem>>, vector<1x60xf32>
    %12 = vector.broadcast %11 : vector<1x60xf32> to vector<8x60xf32>
    %13 = arith.addf %10, %12 : vector<8x60xf32>
    %14 = vector.extract_strided_slice %13 {offsets = [0, 0], sizes = [8, 30], strides = [1, 1]} : vector<8x60xf32> to vector<8x30xf32>
    %15 = vector.extract_strided_slice %13 {offsets = [0, 30], sizes = [8, 30], strides = [1, 1]} : vector<8x60xf32> to vector<8x30xf32>
    %16 = arith.negf %15 : vector<8x30xf32>
    %17 = math.exp %16 : vector<8x30xf32>
    %cst_11 = arith.constant 1.000000e+00 : f32
    %18 = vector.broadcast %cst_11 : f32 to vector<8x30xf32>
    %19 = arith.addf %18, %17 : vector<8x30xf32>
    %20 = arith.divf %18, %19 : vector<8x30xf32>
    %cst_12 = arith.constant 2.000000e+01 : f32
    %21 = vector.broadcast %cst_12 : f32 to vector<8x30xf32>
    %22 = arith.mulf %20, %21 : vector<8x30xf32>
    %cst_13 = arith.constant 5.000000e-01 : f32
    %23 = vector.broadcast %cst_13 : f32 to vector<8x30xf32>
    %24 = arith.cmpf ogt, %22, %23 : vector<8x30xf32>
    %25 = arith.extui %24 : vector<8x30xi1> to vector<8x30xi32>
    %26 = arith.sitofp %25 : vector<8x30xi32> to vector<8x30xf32>
    %c0_14 = arith.constant 0 : index
    %c0_15 = arith.constant 0 : index
    %27 = vector.load %arg6[%c0_14, %c0_15] : memref<1x30xf32, #tpu.memory_space<vmem>>, vector<1x30xf32>
    %28 = vector.broadcast %27 : vector<1x30xf32> to vector<8x30xf32>
    %29 = arith.mulf %28, %22 : vector<8x30xf32>
    %cst_16 = arith.constant 1.000000e+00 : f32
    %30 = vector.broadcast %cst_16 : f32 to vector<1x30xf32>
    %31 = arith.subf %30, %27 : vector<1x30xf32>
    %32 = math.tanh %14 : vector<8x30xf32>
    %33 = arith.mulf %32, %26 : vector<8x30xf32>
    %34 = vector.broadcast %31 : vector<1x30xf32> to vector<8x30xf32>
    %35 = arith.mulf %34, %33 : vector<8x30xf32>
    %36 = arith.addf %29, %35 : vector<8x30xf32>
    %c0_17 = arith.constant 0 : index
    %c0_18 = arith.constant 0 : index
    %37 = vector.load %arg7[%c0_17, %c0_18] : memref<8x30xf32, #tpu.memory_space<vmem>>, vector<8x30xf32>
    tpu.vector_store %arg7[%c0_17, %c0_18], %36 {strides = array<i32>} : memref<8x30xf32, #tpu.memory_space<vmem>>, vector<8x30xf32>,
    return
  }
  func.func @transform_0(%arg0: i32) -> (i32, i32) {
    %c0_i32 = arith.constant 0 : i32
    %c0_i32_0 = arith.constant 0 : i32
    return %arg0, %c0_i32 : i32, i32
  }
  func.func @transform_1(%arg0: i32) -> (i32, i32) {
    %c0_i32 = arith.constant 0 : i32
    %c0_i32_0 = arith.constant 0 : i32
    %c0_i32_1 = arith.constant 0 : i32
    return %c0_i32, %c0_i32_0 : i32, i32
  }
  func.func @transform_2(%arg0: i32) -> (i32, i32) {
    %c0_i32 = arith.constant 0 : i32
    %c0_i32_0 = arith.constant 0 : i32
    %c0_i32_1 = arith.constant 0 : i32
    return %c0_i32, %c0_i32_0 : i32, i32
  }
  func.func @transform_3(%arg0: i32) -> (i32, i32) {
    %c0_i32 = arith.constant 0 : i32
    %c0_i32_0 = arith.constant 0 : i32
    %c0_i32_1 = arith.constant 0 : i32
    return %c0_i32, %c0_i32_0 : i32, i32
  }
  func.func @transform_4(%arg0: i32) -> (i32, i32) {
    %c0_i32 = arith.constant 0 : i32
    %c0_i32_0 = arith.constant 0 : i32
    %c0_i32_1 = arith.constant 0 : i32
    return %c0_i32, %c0_i32_0 : i32, i32
  }
  func.func @transform_5(%arg0: i32) -> (i32, i32) {
    %c0_i32 = arith.constant 0 : i32
    %c0_i32_0 = arith.constant 0 : i32
    %c0_i32_1 = arith.constant 0 : i32
    return %c0_i32, %c0_i32_0 : i32, i32
  }
  func.func @transform_6(%arg0: i32) -> (i32, i32) {
    %c0_i32 = arith.constant 0 : i32
    %c0_i32_0 = arith.constant 0 : i32
    return %arg0, %c0_i32 : i32, i32
  }
}

</mosaic_0001>

<llo_original>
// kernel: tpu_custom_call.1
$region0: #{tpu_custom_call.1}
  #allocation0 [shape = 'u32[]', space=smem, size = 0x4, offset = 0x4, fixed_abs, tag = 'smem constant byte address 0x4 - core index']
  #allocation1 [shape = 'u32[144,128]{1,0:T(1,128)}', space=vmem, size = 0x12000, scoped, tag = 'internal scratch']
  %s0 = inlined_call_operand.hbm [shape: bf16[8,32], index: 0, kind: input, shape index: {}]
  %s1 = inlined_call_operand.hbm [shape: bf16[32,64], index: 1, kind: input, shape index: {}]
  %s2 = inlined_call_operand.vmem [shape: f32[1,64], index: 2, kind: input, shape index: {}]
  %s3 = inlined_call_operand.hbm [shape: bf16[64,60], index: 3, kind: input, shape index: {}]
  %s4 = inlined_call_operand.vmem [shape: f32[1,60], index: 4, kind: input, shape index: {}]
  %s5 = inlined_call_operand.vmem [shape: f32[1,30], index: 5, kind: input, shape index: {}]
  %s6 = inlined_call_operand.hbm [shape: f32[8,30], index: 6, kind: output, shape index: {}]
  %s7 = sld [smem:[#allocation0]]
  $region46: #{tpu_custom_call.1} parent=0
    _
  %s9 = ssub.s32 1, %s7
  %s10 = scalar_select 0, %s9, %s7
  $region1: #{tpu_custom_call.1} parent=0
    #allocation2 [shape = 'u8[2048]{0}', space=vmem, size = 0x800, scoped, tag = 'input window, operand 0, single buffered']
    #allocation3 [shape = 's32[1]{0}', space=sflag, size = 0x4, scoped, tag = 'scoped memory for tpu_custom_call.1']
    #allocation4 [shape = 's32[1]{0}', space=sflag, size = 0x4, scoped, tag = 'scoped memory for tpu_custom_call.1']
    #allocation5 [shape = 'u8[8192]{0}', space=vmem, size = 0x2000, scoped, tag = 'input window, operand 1, single buffered']
    #allocation6 [shape = 's32[1]{0}', space=sflag, size = 0x4, scoped, tag = 'scoped memory for tpu_custom_call.1']
    #allocation7 [shape = 'u8[16384]{0}', space=vmem, size = 0x4000, scoped, tag = 'input window, operand 3, single buffered']
    #allocation8 [shape = 'u8[4096]{0}', space=vmem, size = 0x1000, scoped, tag = 'output window, operand 0, single buffered']
    %11 = vsyncpa [#allocation3], 0
    %12 = vsyncpa [#allocation6], 0
    %13 = vsyncpa [#allocation4], 0
    // Predicated region
    $region2: #{tpu_custom_call.1} parent=1 // pred_check
      _
    $region3: #{tpu_custom_call.1} parent=1 // pred_check_branch
      %15 = sbr.rel (0) target = $region5
    $region4: #{tpu_custom_call.1} parent=1 // pred_region
      %s17 = ssub.s32 64, 64
      %18 = vsyncadd [#allocation3], %s17
      %s20 = sshll.u32 [#allocation2], 4
      %s21 = int_to_ptr.vmem [resolvable:$true] %s20
      %23 = dma.hbm_to_vmem [thread:$0]  %s0, 64, %s21, [#allocation3]
    $region5: #{tpu_custom_call.1} parent=1 // pred_fallthru
      _
    // Predicated region
    $region6: #{tpu_custom_call.1} parent=1 // pred_check
      _
    $region7: #{tpu_custom_call.1} parent=1 // pred_check_branch
      %25 = sbr.rel (0) target = $region9
    $region8: #{tpu_custom_call.1} parent=1 // pred_region
      %s27 = ssub.s32 256, 256
      %28 = vsyncadd [#allocation6], %s27
      %s29 = sshll.u32 [#allocation5], 4
      %s30 = int_to_ptr.vmem [resolvable:$true] %s29
      %35 = dma.hbm_to_vmem [thread:$0]  %s1, 256, %s30, [#allocation6], 64, 64, 4
    $region9: #{tpu_custom_call.1} parent=1 // pred_fallthru
      _
    // Predicated region
    $region10: #{tpu_custom_call.1} parent=1 // pred_check
      _
    $region11: #{tpu_custom_call.1} parent=1 // pred_check_branch
      %37 = sbr.rel (0) target = $region13
    $region12: #{tpu_custom_call.1} parent=1 // pred_region
      _
    $region13: #{tpu_custom_call.1} parent=1 // pred_fallthru
      _
    // Predicated region
    $region14: #{tpu_custom_call.1} parent=1 // pred_check
      _
    $region15: #{tpu_custom_call.1} parent=1 // pred_check_branch
      %39 = sbr.rel (0) target = $region17
    $region16: #{tpu_custom_call.1} parent=1 // pred_region
      %s41 = ssub.s32 512, 512
      %42 = vsyncadd [#allocation6], %s41
      %s43 = sshll.u32 [#allocation7], 4
      %s44 = int_to_ptr.vmem [resolvable:$true] %s43
      %49 = dma.hbm_to_vmem [thread:$0]  %s3, 512, %s44, [#allocation6], 64, 64, 4
    $region17: #{tpu_custom_call.1} parent=1 // pred_fallthru
      _
    // Predicated region
    $region18: #{tpu_custom_call.1} parent=1 // pred_check
      _
    $region19: #{tpu_custom_call.1} parent=1 // pred_check_branch
      %51 = sbr.rel (0) target = $region21
    $region20: #{tpu_custom_call.1} parent=1 // pred_region
      _
    $region21: #{tpu_custom_call.1} parent=1 // pred_fallthru
      _
    // Predicated region
    $region22: #{tpu_custom_call.1} parent=1 // pred_check
      _
    $region23: #{tpu_custom_call.1} parent=1 // pred_check_branch
      %53 = sbr.rel (0) target = $region25
    $region24: #{tpu_custom_call.1} parent=1 // pred_region
      _
    $region25: #{tpu_custom_call.1} parent=1 // pred_fallthru
      _
    // Predicated region
    $region26: #{tpu_custom_call.1} parent=1 // pred_check
      _
    $region27: #{tpu_custom_call.1} parent=1 // pred_check_branch
      %55 = sbr.rel (0) target = $region29
    $region28: #{tpu_custom_call.1} parent=1 // pred_region
      %56 = dma.done [#allocation3], 64
    $region29: #{tpu_custom_call.1} parent=1 // pred_fallthru
      _
    // Predicated region
    $region30: #{tpu_custom_call.1} parent=1 // pred_check
      _
    $region31: #{tpu_custom_call.1} parent=1 // pred_check_branch
      %58 = sbr.rel (0) target = $region33
    $region32: #{tpu_custom_call.1} parent=1 // pred_region
      %59 = dma.done [#allocation6], 256
    $region33: #{tpu_custom_call.1} parent=1 // pred_fallthru
      _
    // Predicated region
    $region34: #{tpu_custom_call.1} parent=1 // pred_check
      _
    $region35: #{tpu_custom_call.1} parent=1 // pred_check_branch
      %61 = sbr.rel (0) target = $region37
    $region36: #{tpu_custom_call.1} parent=1 // pred_region
      %62 = dma.done [#allocation6], 512
    $region37: #{tpu_custom_call.1} parent=1 // pred_fallthru
      _
    %v64 = vld [vmem:[#allocation2] sm:$0xf]
    %v65 = vld [vmem:[#allocation5] sm:$0xf]
    %v66 = vld [vmem:[#allocation5 + $0x4] sm:$0xf]
    %v67 = vld [vmem:[#allocation5 + $0x8] sm:$0xf]
    %v68 = vld [vmem:[#allocation5 + $0xc] sm:$0xf]
    %v69 = vld [vmem:[%s2] sm:$0x1]
    %v71 = vlaneseq
    %v72 = vshrl.u32 %v71, 7
    %v73 = vsub.s32 0, %v72
    %v74 = vrot.slane %v69, %v73
    %v80 = vunpack.c.l.b16 %v65
    %v81 = vunpack.c.l.b16 %v66
    %v82 = vunpack.c.l.b16 %v67
    %v83 = vunpack.c.l.b16 %v68
    %v84 = vpack.c.b16 %v81, %v80
    %v85 = vpack.c.b16 %v83, %v82
    %vm88 = vcmask 261120
    %v90 = vsel %vm88, %v64, 0
    %92 = vmatprep.subr.bf16.mxu0 0
    %93 = vmatpush1.bf16.msra.mxu0 %v84
    %94 = vmatprep.subr.bf16.mxu0 0
    %95 = vmatpush1.bf16.msra.mxu0 %v85
    %96 = vmatprep.subr.bf16.mxu0 0
    %97 = vmatpush1.bf16.msra.mxu0 0
    %98 = vmatprep.subr.bf16.mxu0 0
    %99 = vmatpush1.bf16.msra.mxu0 0
    %100 = vmatprep.subr.bf16.mxu0 0
    %101 = vmatpush1.bf16.msra.mxu0 0
    %102 = vmatprep.subr.bf16.mxu0 0
    %103 = vmatpush1.bf16.msra.mxu0 0
    %104 = vmatprep.subr.bf16.mxu0 0
    %105 = vmatpush1.bf16.msra.mxu0 0
    %106 = vmatprep.subr.bf16.mxu0 0
    %107 = vmatpush1.bf16.msra.mxu0 0
    %108 = vmatprep.subr.bf16.mxu0 0
    %109 = vmatpush1.bf16.msra.mxu0 0
    %110 = vmatprep.subr.bf16.mxu0 0
    %111 = vmatpush1.bf16.msra.mxu0 0
    %112 = vmatprep.subr.bf16.mxu0 0
    %113 = vmatpush1.bf16.msra.mxu0 0
    %114 = vmatprep.subr.bf16.mxu0 0
    %115 = vmatpush1.bf16.msra.mxu0 0
    %116 = vmatprep.subr.bf16.mxu0 0
    %117 = vmatpush1.bf16.msra.mxu0 0
    %118 = vmatprep.subr.bf16.mxu0 0
    %119 = vmatpush1.bf16.msra.mxu0 0
    %120 = vmatprep.subr.bf16.mxu0 0
    %121 = vmatpush1.bf16.msra.mxu0 0
    %122 = vmatprep.subr.bf16.mxu0 0
    %123 = vmatpush1.bf16.msra.mxu0 0
    %124 = vmatprep.mubr.bf16.mxu0 0
    %125 = vmatmul.mubr.bf16.gmra.mrb[0].mxu0 %v90
    %v126 = vpop.f32.mrb[0].mxu0
    %v127 = vadd.f32 %v74, %v126
    %v128 = vpop.f32.mrb[0].mxu0
    %v129 = vpop.f32.mrb[0].mxu0
    %v130 = vpop.f32.mrb[0].mxu0
    %131 = vdwg.mxu0
    %v132 = vmax.f32 %v127, 0.0
    %v133 = vpack.c.bf16 %v132, %v132
    %v134 = vld [vmem:[#allocation7] sm:$0xf]
    %v135 = vld [vmem:[#allocation7 + $0x4] sm:$0xf]
    %v136 = vld [vmem:[#allocation7 + $0x8] sm:$0xf]
    %v137 = vld [vmem:[#allocation7 + $0xc] sm:$0xf]
    %v138 = vld [vmem:[#allocation7 + $0x10] sm:$0xf]
    %v139 = vld [vmem:[#allocation7 + $0x14] sm:$0xf]
    %v140 = vld [vmem:[#allocation7 + $0x18] sm:$0xf]
    %v141 = vld [vmem:[#allocation7 + $0x1c] sm:$0xf]
    %v142 = vld [vmem:[%s4] sm:$0x1]
    %v144 = vlaneseq
    %v145 = vshrl.u32 %v144, 7
    %v146 = vsub.s32 0, %v145
    %v147 = vrot.slane %v142, %v146
    %v157 = vunpack.c.l.b16 %v134
    %v158 = vunpack.c.l.b16 %v135
    %v159 = vunpack.c.l.b16 %v136
    %v160 = vunpack.c.l.b16 %v137
    %v161 = vunpack.c.l.b16 %v138
    %v162 = vunpack.c.l.b16 %v139
    %v163 = vunpack.c.l.b16 %v140
    %v164 = vunpack.c.l.b16 %v141
    %v165 = vpack.c.b16 %v158, %v157
    %v166 = vpack.c.b16 %v160, %v159
    %v167 = vpack.c.b16 %v162, %v161
    %v168 = vpack.c.b16 %v164, %v163
    %vm173 = vcmask 523264
    %v175 = vsel %vm173, %v133, 0
    %177 = vmatprep.subr.bf16.mxu0 0
    %178 = vmatpush1.bf16.msra.mxu0 %v165
    %179 = vmatprep.subr.bf16.mxu0 0
    %180 = vmatpush1.bf16.msra.mxu0 %v166
    %181 = vmatprep.subr.bf16.mxu0 0
    %182 = vmatpush1.bf16.msra.mxu0 %v167
    %183 = vmatprep.subr.bf16.mxu0 0
    %184 = vmatpush1.bf16.msra.mxu0 %v168
    %185 = vmatprep.subr.bf16.mxu0 0
    %186 = vmatpush1.bf16.msra.mxu0 0
    %187 = vmatprep.subr.bf16.mxu0 0
    %188 = vmatpush1.bf16.msra.mxu0 0
    %189 = vmatprep.subr.bf16.mxu0 0
    %190 = vmatpush1.bf16.msra.mxu0 0
    %191 = vmatprep.subr.bf16.mxu0 0
    %192 = vmatpush1.bf16.msra.mxu0 0
    %193 = vmatprep.subr.bf16.mxu0 0
    %194 = vmatpush1.bf16.msra.mxu0 0
    %195 = vmatprep.subr.bf16.mxu0 0
    %196 = vmatpush1.bf16.msra.mxu0 0
    %197 = vmatprep.subr.bf16.mxu0 0
    %198 = vmatpush1.bf16.msra.mxu0 0
    %199 = vmatprep.subr.bf16.mxu0 0
    %200 = vmatpush1.bf16.msra.mxu0 0
    %201 = vmatprep.subr.bf16.mxu0 0
    %202 = vmatpush1.bf16.msra.mxu0 0
    %203 = vmatprep.subr.bf16.mxu0 0
    %204 = vmatpush1.bf16.msra.mxu0 0
    %205 = vmatprep.subr.bf16.mxu0 0
    %206 = vmatpush1.bf16.msra.mxu0 0
    %207 = vmatprep.subr.bf16.mxu0 0
    %208 = vmatpush1.bf16.msra.mxu0 0
    %209 = vmatprep.mubr.bf16.mxu0 0
    %210 = vmatmul.mubr.bf16.gmra.mrb[0].mxu0 %v175
    %v211 = vpop.f32.mrb[0].mxu0
    %v212 = vadd.f32 %v147, %v211
    %v213 = vpop.f32.mrb[0].mxu0
    %v214 = vpop.f32.mrb[0].mxu0
    %v215 = vpop.f32.mrb[0].mxu0
    %216 = vdwg.mxu0
    %v217 = vxor.u32 %v212, 2147483648
    %v218 = vmul.f32 %v217, 1.442695
    %v219 = vpow.pop %v218
    %v220 = vadd.f32 %v219, 1.0
    %v221 = vrcp.pop %v220
    %v222 = vmul.f32 1.0, %v221
    %v223 = vmul.f32 %v222, 20.0
    %vm224 = vcmp.gt.f32.partialorder %v223, 0.5
    %v225 = vsel %vm224, 1, 0
    %v226 = vcvt.s32.f32 %v225
    %v227 = vld [vmem:[%s5] sm:$0x1]
    %v229 = vlaneseq
    %v230 = vshrl.u32 %v229, 7
    %v231 = vsub.s32 0, %v230
    %v232 = vrot.slane %v227, %v231
    %235 = vrot.lane.b32.xlu0 %v223, 98
    %v236 = vpop.permute.xlu0 %235
    %v238 = vmul.f32 %v232, %v236
    %v239 = vsub.f32 1.0, %v227
    %v240 = vtanh.pop %v212
    %242 = vrot.lane.b32.xlu0 %v226, 98
    %v243 = vpop.permute.xlu0 %242
    %v245 = vmul.f32 %v240, %v243
    %v247 = vlaneseq
    %v248 = vshrl.u32 %v247, 7
    %v249 = vsub.s32 0, %v248
    %v250 = vrot.slane %v239, %v249
    %v252 = vmul.f32 %v250, %v245
    %v253 = vadd.f32 %v238, %v252
    %vm254 = vcmask 244736
    %255 = vst.msk [vmem:[#allocation8] sm:$0xff] %vm254, %v253
    // Predicated region
    $region38: #{tpu_custom_call.1} parent=1 // pred_check
      _
    $region39: #{tpu_custom_call.1} parent=1 // pred_check_branch
      %257 = sbr.rel (0) target = $region41
    $region40: #{tpu_custom_call.1} parent=1 // pred_region
      %s259 = ssub.s32 128, 128
      %260 = vsyncadd [#allocation4], %s259
      %s262 = sshll.u32 [#allocation8], 4
      %s263 = int_to_ptr.vmem [resolvable:$true] %s262
      %265 = dma.vmem_to_hbm [thread:$0]  %s263, 128, %s6, [#allocation4]
    $region41: #{tpu_custom_call.1} parent=1 // pred_fallthru
      _
    // Predicated region
    $region42: #{tpu_custom_call.1} parent=1 // pred_check
      _
    $region43: #{tpu_custom_call.1} parent=1 // pred_check_branch
      %267 = sbr.rel (0) target = $region45
    $region44: #{tpu_custom_call.1} parent=1 // pred_region
      %268 = dma.done [#allocation4], 128
    $region45: #{tpu_custom_call.1} parent=1 // pred_fallthru
      _
    %269 = vsyncpa [#allocation3], 1
    %270 = vsyncpa [#allocation6], 1
    %271 = vsyncpa [#allocation4], 1

</llo_original>
